<compile_context>
chip_gen: v7x
topology: tpu7x:2x2x1
jax: 0.10.0
libtpu: 0.0.40
codegen_flags: <defaults>
</compile_context>

<pallas_src>
from functools import partial

import numpy as np
import jax
import jax.numpy as jnp
from jax.experimental import pallas as pl
from jax.experimental.pallas import tpu as pltpu

BN_EPS = 1e-5
H = W = 8
P = H * W                        # 64 spatial positions per image
TILE_ROWS = 1024                 # max images per grid step (amortizes ~0.35 us/step overhead)
VMEM_BUDGET = 48 * 1024 * 1024   # safe scoped-VMEM cap on v5e/v6e (128 MiB phys) and v7x (64 MiB)
SINGLE_BUFFER_T_BYTES = 4 * 1024 * 1024  # single-buffer the constant operator only when it matters


def _build_spatial_taps():
    """S[kh, kw, q, p] = 1 where output position p reads input position q for tap (kh, kw)."""
    p = np.arange(P)
    ph, pw = p // W, p % W
    S = np.zeros((3, 3, P, P), np.float32)
    for kh in range(3):
        for kw in range(3):
            qh, qw = ph + kh - 1, pw + kw - 1
            valid = (qh >= 0) & (qh < H) & (qw >= 0) & (qw < W)
            q = qh * W + qw
            S[kh, kw, q[valid], p[valid]] = 1.0
    return S


_S_TAPS = _build_spatial_taps()


def stats_kernel(x_ref, t_ref, stats_ref):
    # Phase 1: conv matmul -> per-tile column sum / sum-of-squares ONLY.
    # x_ref: (tn, Cin*64) natural dtype (cast to bf16 in-register), t_ref: (Cin*64, Cout*64) bf16,
    # stats_ref: (2, Cout*64) f32 per-tile [col_sum; col_sumsq].
    acc = jnp.dot(x_ref[...].astype(jnp.bfloat16), t_ref[...],
                  preferred_element_type=jnp.float32)
    s = jnp.sum(acc, axis=0, keepdims=True)
    ss = jnp.sum(acc * acc, axis=0, keepdims=True)
    stats_ref[...] = jnp.concatenate([s, ss], axis=0)


def conv_bn_relu_kernel(x_ref, t_ref, a_ref, b_ref, o_ref):
    # Phase 2: recompute the conv matmul and fuse folded BatchNorm (per-column scale/shift) + ReLU.
    # Single lane-dense (>= 512 wide) store; no conv intermediate ever round-trips HBM.
    acc = jnp.dot(x_ref[...].astype(jnp.bfloat16), t_ref[...],
                  preferred_element_type=jnp.float32)
    o_ref[...] = jnp.maximum(acc * a_ref[...] + b_ref[...], 0.0).astype(o_ref.dtype)


def _vmem_estimate(rows, K, C, x_itemsize, out_itemsize, t_bytes, t_single):
    t_alloc = t_bytes if t_single else 2 * t_bytes
    return (2 * rows * K * x_itemsize              # double-buffered activation tiles
            + 2 * rows * C * max(out_itemsize, 4)  # double-buffered output tiles (f32 acc floor)
            + t_alloc                              # folded conv operator
            + (2 << 20))                           # scratch / scalar headroom


@partial(jax.jit, static_argnames=("input_channels", "out_dtype"))
def convolutional_block_forward(x, weight, bias, gamma, beta, *, input_channels,
                                out_dtype=jnp.float32):
    """conv3x3(pad=1) + train-mode BatchNorm2d + ReLU on the fixed 8x8 spatial grid."""
    del bias  # conv bias cancels exactly under train-mode BN mean subtraction
    x = x.reshape(-1, input_channels, H, W)        # mirrors torch .view(-1, Cin, 8, 8)
    N, Cin = x.shape[0], input_channels
    Cout = weight.shape[0]
    K, C = Cin * P, Cout * P

    # Fold conv3x3(pad=1) into a dense (Cin*64, Cout*64) block-Toeplitz operator built from the
    # tiny 3x3 weights.  NOTE: dense T does ~64/9x the true conv FLOPs -- fine while HBM-bound
    # (small Cin*Cout); for Cin,Cout >= ~128 switch to a 9-tap shifted-matmul accumulation.
    T = jnp.einsum("oikl,klqp->iqop", weight.astype(jnp.float32), jnp.asarray(_S_TAPS))
    T2 = T.reshape(K, C).astype(jnp.bfloat16)
    t_bytes = K * C * 2
    t_single = t_bytes >= SINGLE_BUFFER_T_BYTES

    # Activations: straight reshape, read at natural dtype (bf16 cast happens inside the kernels,
    # so the wrapper never materializes a separate bf16 copy in HBM).
    x2 = x.reshape(N, K)
    x_itemsize = x2.dtype.itemsize
    out_itemsize = jnp.dtype(out_dtype).itemsize

    # --- Row tiling ------------------------------------------------------------------------
    # >= 2 grid steps so both v7x TensorCores get work; tn multiple of 8 (sublane alignment);
    # shrink tn until the per-step working set fits the VMEM budget.
    tn = max(8, min(TILE_ROWS, 8 * pl.cdiv(N, 16)))
    while tn > 8 and _vmem_estimate(tn, K, C, x_itemsize, out_itemsize,
                                    t_bytes, t_single) > VMEM_BUDGET:
        tn = max(8, 8 * ((tn // 2 + 7) // 8))
    num_tiles = max(2, pl.cdiv(N, tn))
    n_pad = num_tiles * tn
    # Zero-row padding is BN-transparent: with no conv bias, padded rows contribute exactly 0 to
    # the column sums / sums-of-squares, and `count` below uses the true N.
    x2p = jnp.pad(x2, ((0, n_pad - N), (0, 0))) if n_pad != N else x2

    vmem_limit = int(min(VMEM_BUDGET,
                         max(32 * 1024 * 1024,
                             _vmem_estimate(tn, K, C, x_itemsize, out_itemsize,
                                            t_bytes, t_single))))
    cparams = pltpu.CompilerParams(dimension_semantics=("parallel",),
                                   vmem_limit_bytes=vmem_limit)

    # Constant operator: index_map never changes, so once it is VMEM-significant request a single
    # buffer for it (frees K*C*2 bytes -- essential headroom at large channel counts on v7x).
    if t_single:
        t_spec = pl.BlockSpec((K, C), lambda i: (0, 0), pipeline_mode=pl.Buffered(1))
    else:
        t_spec = pl.BlockSpec((K, C), lambda i: (0, 0))
    # NOTE: at Cin,Cout >= ~64 on v7x (64 MiB VMEM) also add a parallel C-split grid axis
    # (blocks of 512-1024 lanes) and shrink tn; not needed for this channel configuration.

    # Phase 1: per-tile partial BN statistics -- no (N, C) conv intermediate touches HBM.
    stats = pl.pallas_call(
        stats_kernel,
        grid=(num_tiles,),
        in_specs=[pl.BlockSpec((tn, K), lambda i: (i, 0)), t_spec],
        out_specs=pl.BlockSpec((None, 2, C), lambda i: (i, 0, 0)),
        out_shape=jax.ShapeDtypeStruct((num_tiles, 2, C), jnp.float32),
        compiler_params=cparams,
    )(x2p, T2)

    # Global (whole-batch) BN statistics folded into per-channel scale/shift (tiny XLA math).
    # NOTE: var = E[x^2] - E[x]^2 in f32; acceptable here (no conv bias, zero-mean-ish inputs);
    # use a shifted/compensated accumulation if conv outputs can carry a large mean.
    col_sum = jnp.sum(stats[:, 0, :], axis=0)
    col_sumsq = jnp.sum(stats[:, 1, :], axis=0)
    count = jnp.float32(N * P)
    mean = col_sum.reshape(Cout, P).sum(axis=1) / count
    var = col_sumsq.reshape(Cout, P).sum(axis=1) / count - mean * mean
    var = jnp.maximum(var, 0.0)
    inv_std = jax.lax.rsqrt(var + BN_EPS)
    a_ch = gamma.astype(jnp.float32) * inv_std
    b_ch = beta.astype(jnp.float32) - mean * a_ch
    a_cols = jnp.repeat(a_ch, P).reshape(1, C)
    b_cols = jnp.repeat(b_ch, P).reshape(1, C)

    # Phase 2: recompute conv, apply folded BN + ReLU, single lane-dense store.
    out2 = pl.pallas_call(
        conv_bn_relu_kernel,
        grid=(num_tiles,),
        in_specs=[
            pl.BlockSpec((tn, K), lambda i: (i, 0)),
            t_spec,
            pl.BlockSpec((1, C), lambda i: (0, 0)),
            pl.BlockSpec((1, C), lambda i: (0, 0)),
        ],
        out_specs=pl.BlockSpec((tn, C), lambda i: (i, 0)),
        out_shape=jax.ShapeDtypeStruct((n_pad, C), out_dtype),
        compiler_params=cparams,
    )(x2p, T2, a_cols, b_cols)

    # Column order is co*64 + (h*8 + w): reshapes straight to NCHW, no transpose.
    return out2[:N].reshape(N, Cout, H, W)


def _reference(x, weight, bias, gamma, beta, input_channels):
    x = x.reshape(-1, input_channels, H, W).astype(jnp.float32)
    conv = jax.lax.conv_general_dilated(
        x, weight.astype(jnp.float32), window_strides=(1, 1), padding="SAME",
        dimension_numbers=("NCHW", "OIHW", "NCHW"),
    ) + bias.reshape(1, -1, 1, 1)
    mean = conv.mean(axis=(0, 2, 3), keepdims=True)
    var = ((conv - mean) ** 2).mean(axis=(0, 2, 3), keepdims=True)
    y = (conv - mean) * jax.lax.rsqrt(var + BN_EPS)
    y = y * gamma.reshape(1, -1, 1, 1) + beta.reshape(1, -1, 1, 1)
    return jnp.maximum(y, 0.0)


if __name__ == "__main__":
    input_channels = 4
    output_channels = 8
    N = 2

    key = jax.random.PRNGKey(0)
    k_x, k_w, k_b, k_g, k_be = jax.random.split(key, 5)

    x = jax.random.normal(k_x, (N, input_channels, 8, 8), dtype=jnp.float32)
    weight = 0.1 * jax.random.normal(
        k_w, (output_channels, input_channels, 3, 3), dtype=jnp.float32)
    bias = 0.1 * jax.random.normal(k_b, (output_channels,), dtype=jnp.float32)
    gamma = 1.0 + 0.1 * jax.random.normal(k_g, (output_channels,), dtype=jnp.float32)
    beta = 0.1 * jax.random.normal(k_be, (output_channels,), dtype=jnp.float32)

    out = convolutional_block_forward(x, weight, bias, gamma, beta,
                                      input_channels=input_channels)
    out = jax.block_until_ready(out)

    ref = _reference(x, weight, bias, gamma, beta, input_channels)
    assert out.shape == (N, output_channels, 8, 8)
    # bf16 MXU operands (f32 accumulation) -> slightly loosened tolerance vs f32 reference.
    assert jnp.allclose(out, ref, atol=5e-2, rtol=5e-2), "mismatch vs JAX reference"

    print("KERNEL_OK")
</pallas_src>

<mosaic_0001>
module attributes {stable_mosaic.version = 11 : i64} {
  func.func @stats_kernel(%arg0: i32, %arg1: memref<8x256xf32, #tpu.memory_space<vmem>>, %arg2: memref<256x512xbf16, #tpu.memory_space<vmem>>, %arg3: memref<1x2x512xf32, #tpu.memory_space<vmem>>) attributes {dimension_semantics = [#tpu.dimension_semantics<parallel>], iteration_bounds = array<i64: 2>, scalar_prefetch = 0 : i64, scratch_operands = 0 : i64, tpu.core_type = #tpu.core_type<tc>, window_params = [{transform_indices = @transform_0, window_bounds = array<i64: 8, 256>}, {pipeline_mode = #tpu.pipeline_mode<synchronous>, transform_indices = @transform_1, window_bounds = array<i64: 256, 512>}, {transform_indices = @transform_2, window_bounds = array<i64: 1, 2, 512>}]} {
    %c0 = arith.constant 0 : index
    %c0_0 = arith.constant 0 : index
    %0 = vector.load %arg1[%c0, %c0_0] : memref<8x256xf32, #tpu.memory_space<vmem>>, vector<8x256xf32>
    %1 = arith.truncf %0 : vector<8x256xf32> to vector<8x256xbf16>
    %c0_1 = arith.constant 0 : index
    %c0_2 = arith.constant 0 : index
    %2 = vector.load %arg2[%c0_1, %c0_2] : memref<256x512xbf16, #tpu.memory_space<vmem>>, vector<256x512xbf16>
    %cst = arith.constant dense<0.000000e+00> : vector<8x512xf32>
    %3 = tpu.matmul %1, %2, %cst {dimension_numbers = #tpu.dot_dimension_numbers<[1], [0], [0], [1], [0, 0, 1, 1], [], []>} : vector<8x256xbf16>, vector<256x512xbf16>, vector<8x512xf32> -> vector<8x512xf32>
    %cst_3 = arith.constant dense<0.000000e+00> : vector<512xf32>
    %4 = vector.multi_reduction <add>, %3, %cst_3 [0] : vector<8x512xf32> to vector<512xf32>
    %5 = vector.shape_cast %4 : vector<512xf32> to vector<1x512xf32>
    %6 = arith.mulf %3, %3 : vector<8x512xf32>
    %cst_4 = arith.constant dense<0.000000e+00> : vector<512xf32>
    %7 = vector.multi_reduction <add>, %6, %cst_4 [0] : vector<8x512xf32> to vector<512xf32>
    %8 = vector.shape_cast %7 : vector<512xf32> to vector<1x512xf32>
    %9 = tpu.concatenate %5, %8 in 0 : vector<1x512xf32>, vector<1x512xf32> -> vector<2x512xf32>
    %c0_5 = arith.constant 0 : index
    %c0_6 = arith.constant 0 : index
    %c0_7 = arith.constant 0 : index
    %10 = vector.load %arg3[%c0_5, %c0_6, %c0_7] : memref<1x2x512xf32, #tpu.memory_space<vmem>>, vector<1x2x512xf32>
    %11 = vector.shape_cast %10 : vector<1x2x512xf32> to vector<2x512xf32>
    %12 = vector.shape_cast %9 : vector<2x512xf32> to vector<1x2x512xf32>
    tpu.vector_store %arg3[%c0_5, %c0_6, %c0_7], %12 {strides = array<i32>} : memref<1x2x512xf32, #tpu.memory_space<vmem>>, vector<1x2x512xf32>,
    return
  }
  func.func @transform_0(%arg0: i32) -> (i32, i32) {
    %c0_i32 = arith.constant 0 : i32
    %c0_i32_0 = arith.constant 0 : i32
    return %arg0, %c0_i32 : i32, i32
  }
  func.func @transform_1(%arg0: i32) -> (i32, i32) {
    %c0_i32 = arith.constant 0 : i32
    %c0_i32_0 = arith.constant 0 : i32
    %c0_i32_1 = arith.constant 0 : i32
    return %c0_i32, %c0_i32_0 : i32, i32
  }
  func.func @transform_2(%arg0: i32) -> (i32, i32, i32) {
    %c0_i32 = arith.constant 0 : i32
    %c0_i32_0 = arith.constant 0 : i32
    %c0_i32_1 = arith.constant 0 : i32
    return %arg0, %c0_i32, %c0_i32_0 : i32, i32, i32
  }
}

module attributes {stable_mosaic.version = 11 : i64} {
  func.func @conv_bn_relu_kernel(%arg0: i32, %arg1: memref<8x256xf32, #tpu.memory_space<vmem>>, %arg2: memref<256x512xbf16, #tpu.memory_space<vmem>>, %arg3: memref<1x512xf32, #tpu.memory_space<vmem>>, %arg4: memref<1x512xf32, #tpu.memory_space<vmem>>, %arg5: memref<8x512xf32, #tpu.memory_space<vmem>>) attributes {dimension_semantics = [#tpu.dimension_semantics<parallel>], iteration_bounds = array<i64: 2>, scalar_prefetch = 0 : i64, scratch_operands = 0 : i64, tpu.core_type = #tpu.core_type<tc>, window_params = [{transform_indices = @transform_0, window_bounds = array<i64: 8, 256>}, {pipeline_mode = #tpu.pipeline_mode<synchronous>, transform_indices = @transform_1, window_bounds = array<i64: 256, 512>}, {pipeline_mode = #tpu.pipeline_mode<synchronous>, transform_indices = @transform_2, window_bounds = array<i64: 1, 512>}, {pipeline_mode = #tpu.pipeline_mode<synchronous>, transform_indices = @transform_3, window_bounds = array<i64: 1, 512>}, {transform_indices = @transform_4, window_bounds = array<i64: 8, 512>}]} {
    %c0 = arith.constant 0 : index
    %c0_0 = arith.constant 0 : index
    %0 = vector.load %arg1[%c0, %c0_0] : memref<8x256xf32, #tpu.memory_space<vmem>>, vector<8x256xf32>
    %1 = arith.truncf %0 : vector<8x256xf32> to vector<8x256xbf16>
    %c0_1 = arith.constant 0 : index
    %c0_2 = arith.constant 0 : index
    %2 = vector.load %arg2[%c0_1, %c0_2] : memref<256x512xbf16, #tpu.memory_space<vmem>>, vector<256x512xbf16>
    %cst = arith.constant dense<0.000000e+00> : vector<8x512xf32>
    %3 = tpu.matmul %1, %2, %cst {dimension_numbers = #tpu.dot_dimension_numbers<[1], [0], [0], [1], [0, 0, 1, 1], [], []>} : vector<8x256xbf16>, vector<256x512xbf16>, vector<8x512xf32> -> vector<8x512xf32>
    %c0_3 = arith.constant 0 : index
    %c0_4 = arith.constant 0 : index
    %4 = vector.load %arg3[%c0_3, %c0_4] : memref<1x512xf32, #tpu.memory_space<vmem>>, vector<1x512xf32>
    %5 = vector.broadcast %4 : vector<1x512xf32> to vector<8x512xf32>
    %6 = arith.mulf %3, %5 : vector<8x512xf32>
    %c0_5 = arith.constant 0 : index
    %c0_6 = arith.constant 0 : index
    %7 = vector.load %arg4[%c0_5, %c0_6] : memref<1x512xf32, #tpu.memory_space<vmem>>, vector<1x512xf32>
    %8 = vector.broadcast %7 : vector<1x512xf32> to vector<8x512xf32>
    %9 = arith.addf %6, %8 : vector<8x512xf32>
    %cst_7 = arith.constant 0.000000e+00 : f32
    %10 = vector.broadcast %cst_7 : f32 to vector<8x512xf32>
    %11 = arith.maximumf %9, %10 : vector<8x512xf32>
    %c0_8 = arith.constant 0 : index
    %c0_9 = arith.constant 0 : index
    %12 = vector.load %arg5[%c0_8, %c0_9] : memref<8x512xf32, #tpu.memory_space<vmem>>, vector<8x512xf32>
    tpu.vector_store %arg5[%c0_8, %c0_9], %11 {strides = array<i32>} : memref<8x512xf32, #tpu.memory_space<vmem>>, vector<8x512xf32>,
    return
  }
  func.func @transform_0(%arg0: i32) -> (i32, i32) {
    %c0_i32 = arith.constant 0 : i32
    %c0_i32_0 = arith.constant 0 : i32
    return %arg0, %c0_i32 : i32, i32
  }
  func.func @transform_1(%arg0: i32) -> (i32, i32) {
    %c0_i32 = arith.constant 0 : i32
    %c0_i32_0 = arith.constant 0 : i32
    %c0_i32_1 = arith.constant 0 : i32
    return %c0_i32, %c0_i32_0 : i32, i32
  }
  func.func @transform_2(%arg0: i32) -> (i32, i32) {
    %c0_i32 = arith.constant 0 : i32
    %c0_i32_0 = arith.constant 0 : i32
    %c0_i32_1 = arith.constant 0 : i32
    return %c0_i32, %c0_i32_0 : i32, i32
  }
  func.func @transform_3(%arg0: i32) -> (i32, i32) {
    %c0_i32 = arith.constant 0 : i32
    %c0_i32_0 = arith.constant 0 : i32
    %c0_i32_1 = arith.constant 0 : i32
    return %c0_i32, %c0_i32_0 : i32, i32
  }
  func.func @transform_4(%arg0: i32) -> (i32, i32) {
    %c0_i32 = arith.constant 0 : i32
    %c0_i32_0 = arith.constant 0 : i32
    return %arg0, %c0_i32 : i32, i32
  }
}

</mosaic_0001>

<llo_original>
// kernel: convolutional_block_forward.2
$region0: #{convolutional_block_forward.2}
  #allocation0 [shape = 'u32[]', space=smem, size = 0x4, offset = 0x4, fixed_abs, tag = 'smem constant byte address 0x4 - core index']
  #allocation1 [shape = 'u32[144,128]{1,0:T(1,128)}', space=vmem, size = 0x12000, scoped, tag = 'internal scratch']
  %s0 = inlined_call_operand.vmem [shape: f32[16,256], index: 0, kind: input, shape index: {}]
  %s1 = inlined_call_operand.vmem [shape: bf16[256,512], index: 1, kind: input, shape index: {}]
  %s2 = inlined_call_operand.vmem [shape: f32[2,2,512], index: 2, kind: output, shape index: {}]
  %s3 = sld [smem:[#allocation0]]
  $region41: #{convolutional_block_forward.2} parent=0
    _
  %s5 = ssub.s32 1, %s3
  %s6 = scalar_select 0, %s5, %s3
  loop: start=0, step=1, limit=4
  $region2: #{convolutional_block_forward.2} parent=0 // loop_pre_header
    _
  $region3: #{convolutional_block_forward.2} parent=0 // loop_header
    %s8 = sphi 0, %s12
    %p9 = scmp.ge.s32.totalorder %s8, 4
    %s18 = sphi 0, %s20
    %s21 = sphi 0, %s18
    %s22 = sphi 0, %s21
    %s38 = sphi 0, %s22
    %s42 = sphi 0, %s42
    %s44 = sphi 0, %s42
    %s45 = sphi 0, %s44
    %s59 = sphi 0, %s45
    %s65 = sphi 0, %s67
    %s68 = sphi 0, %s65
    %s69 = sphi 0, %s68
    %s85 = sphi 0, %s69
  $region4: #{convolutional_block_forward.2} parent=0 // loop_header_branch
    %11 = sbr.rel (%p9) target = $region8
  $region5: #{convolutional_block_forward.2} parent=0 // loop_body
    %s13 = ssub.s32 %s8, 1
    %s14 = ssub.s32 %s8, 2
    %s15 = sadd.s32 %s8, 1
    %s16 = ssub.s32 %s8, %s15
    %p17 = scmp.eq.s32.totalorder %s16, 0
    %s19 = sadd.s32 %s18, 1
    %s20 = scalar_select %p17, %s18, %s19
    %p23 = pneg %p17
    %p24 = scmp.eq.s32.totalorder %s8, 1
    %p25 = por %p23, %p24
    %p26 = scmp.ne.s32.totalorder %s18, %s21
    %p27 = scmp.eq.s32.totalorder %s8, 0
    %p28 = por %p26, %p27
    %p29 = scmp.ne.s32.totalorder %s18, %s21
    %p30 = scmp.eq.s32.totalorder %s13, 1
    %p31 = por %p29, %p30
    %p32 = scmp.ne.s32.totalorder %s21, %s22
    %p33 = scmp.eq.s32.totalorder %s13, 0
    %p34 = por %p32, %p33
    %p35 = scmp.ne.s32.totalorder %s21, %s22
    %p36 = scmp.eq.s32.totalorder %s14, 1
    %p37 = por %p35, %p36
    %p39 = scmp.ne.s32.totalorder %s22, %s38
    %p40 = scmp.eq.s32.totalorder %s14, 0
    %p41 = por %p39, %p40
    %s43 = sadd.s32 %s42, 1
    %p46 = scmp.eq.s32.totalorder %s8, 1
    %p47 = scmp.ne.s32.totalorder %s42, %s44
    %p48 = scmp.eq.s32.totalorder %s8, 0
    %p49 = por %p47, %p48
    %p50 = scmp.ne.s32.totalorder %s42, %s44
    %p51 = scmp.eq.s32.totalorder %s13, 1
    %p52 = por %p50, %p51
    %p53 = scmp.ne.s32.totalorder %s44, %s45
    %p54 = scmp.eq.s32.totalorder %s13, 0
    %p55 = por %p53, %p54
    %p56 = scmp.ne.s32.totalorder %s44, %s45
    %p57 = scmp.eq.s32.totalorder %s14, 1
    %p58 = por %p56, %p57
    %p60 = scmp.ne.s32.totalorder %s45, %s59
    %p61 = scmp.eq.s32.totalorder %s14, 0
    %p62 = por %p60, %p61
    %s63 = ssub.s32 %s8, %s15
    %p64 = scmp.eq.s32.totalorder %s63, 0
    %s66 = sadd.s32 %s65, 1
    %s67 = scalar_select %p64, %s65, %s66
    %p70 = pneg %p64
    %p71 = scmp.eq.s32.totalorder %s8, 1
    %p72 = por %p70, %p71
    %p73 = scmp.ne.s32.totalorder %s65, %s68
    %p74 = scmp.eq.s32.totalorder %s8, 0
    %p75 = por %p73, %p74
    %p76 = scmp.ne.s32.totalorder %s65, %s68
    %p77 = scmp.eq.s32.totalorder %s13, 1
    %p78 = por %p76, %p77
    %p79 = scmp.ne.s32.totalorder %s68, %s69
    %p80 = scmp.eq.s32.totalorder %s13, 0
    %p81 = por %p79, %p80
    %p82 = scmp.ne.s32.totalorder %s68, %s69
    %p83 = scmp.eq.s32.totalorder %s14, 1
    %p84 = por %p82, %p83
    %p86 = scmp.ne.s32.totalorder %s69, %s85
    %p87 = scmp.eq.s32.totalorder %s14, 0
    %p88 = por %p86, %p87
    %p89 = scmp.le.s32.totalorder 1, %s8
    %p90 = scmp.lt.s32.totalorder %s8, 3
    %p91 = pnand %p89, %p90
    %p92 = pneg %p91
    // Predicated region
    $region9: #{convolutional_block_forward.2} parent=5 // pred_check
      _
    $region10: #{convolutional_block_forward.2} parent=5 // pred_check_branch
      %94 = sbr.rel (%p91) target = $region12
    $region11: #{convolutional_block_forward.2} parent=5 // pred_region
      %s95 = ssub.s32 %s8, 1
      // Predicated region
      $region13: #{convolutional_block_forward.2} parent=11 // pred_check
        %p96 = pneg %p55
      $region14: #{convolutional_block_forward.2} parent=11 // pred_check_branch
        %98 = sbr.rel (%p96) target = $region16
      $region15: #{convolutional_block_forward.2} parent=11 // pred_region
        _
      $region16: #{convolutional_block_forward.2} parent=11 // pred_fallthru
        _
    $region12: #{convolutional_block_forward.2} parent=5 // pred_fallthru
      _
    %p99 = scmp.lt.s32.totalorder %s8, 2
    // Predicated region
    $region17: #{convolutional_block_forward.2} parent=5 // pred_check
      %p100 = pneg %p99
    $region18: #{convolutional_block_forward.2} parent=5 // pred_check_branch
      %102 = sbr.rel (%p100) target = $region20
    $region19: #{convolutional_block_forward.2} parent=5 // pred_region
      // Predicated region
      $region21: #{convolutional_block_forward.2} parent=19 // pred_check
        %p103 = pneg %p28
      $region22: #{convolutional_block_forward.2} parent=19 // pred_check_branch
        %105 = sbr.rel (%p103) target = $region24
      $region23: #{convolutional_block_forward.2} parent=19 // pred_region
        %p106 = scmp.lt.s32.totalorder %s8, 1
        %s107 = scalar_select %p106, %s8, 1
        %s108 = smul.addr %s107, 2
        %s109 = smul.addr %s108, 8
        %s110 = scalar_lea.vmem %s0, %s109
      $region24: #{convolutional_block_forward.2} parent=19 // pred_fallthru
        _
    $region20: #{convolutional_block_forward.2} parent=5 // pred_fallthru
      _
    %p111 = scmp.le.s32.totalorder 1, %s8
    %p112 = scmp.lt.s32.totalorder %s8, 3
    %p113 = pnand %p111, %p112
    %p114 = pneg %p113
    // Predicated region
    $region25: #{convolutional_block_forward.2} parent=5 // pred_check
      _
    $region26: #{convolutional_block_forward.2} parent=5 // pred_check_branch
      %116 = sbr.rel (%p113) target = $region28
    $region27: #{convolutional_block_forward.2} parent=5 // pred_region
      %s117 = ssub.s32 %s8, 1
      %p118 = scmp.lt.s32.totalorder %s13, 1
      %s119 = scalar_select %p118, %s13, 1
      %s120 = smul.addr %s119, 2
      %s121 = smul.addr %s120, 8
      %s122 = scalar_lea.vmem %s0, %s121
      %p123 = pneg %p34
      %p124 = pneg %p31
      %p125 = pneg %p55
      %p126 = pneg %p52
      %p127 = pneg %p81
      %p128 = pneg %p78
      %p129 = scmp.lt.s32.totalorder %s13, 1
      %s130 = scalar_select %p129, %s13, 1
      %s131 = smul.addr %s130, 4
      %s132 = smul.addr %s131, 2
      %s133 = scalar_lea.vmem %s2, %s132
      %p134 = scmp.lt.s32.totalorder %s13, 1
      %s135 = scalar_select %p134, %s13, 1
      %s136 = smul.addr %s135, 2
      %s137 = smul.addr %s136, 8
      %s138 = scalar_lea.vmem %s0, %s137
      %p139 = scmp.lt.s32.totalorder %s13, 1
      %s140 = scalar_select %p139, %s13, 1
      %s141 = smul.addr %s140, 4
      %s142 = smul.addr %s141, 2
      %s143 = scalar_lea.vmem %s2, %s142
      %v144 = vld [vmem:[%s138] sm:$0xff]
      %v145 = vld [vmem:[%s138 + $0x8] sm:$0xff]
      %v146 = vpack.c.bf16 %v144, %v144
      %v147 = vpack.c.bf16 %v145, %v145
      %v148 = vld [vmem:[%s1] sm:$0xff]
      %v149 = vld [vmem:[%s1 + $0x8] sm:$0xff]
      %v150 = vld [vmem:[%s1 + $0x10] sm:$0xff]
      %v151 = vld [vmem:[%s1 + $0x18] sm:$0xff]
      %v152 = vld [vmem:[%s1 + $0x20] sm:$0xff]
      %v153 = vld [vmem:[%s1 + $0x28] sm:$0xff]
      %v154 = vld [vmem:[%s1 + $0x30] sm:$0xff]
      %v155 = vld [vmem:[%s1 + $0x38] sm:$0xff]
      %v156 = vld [vmem:[%s1 + $0x40] sm:$0xff]
      %v157 = vld [vmem:[%s1 + $0x48] sm:$0xff]
      %v158 = vld [vmem:[%s1 + $0x50] sm:$0xff]
      %v159 = vld [vmem:[%s1 + $0x58] sm:$0xff]
      %v160 = vld [vmem:[%s1 + $0x60] sm:$0xff]
      %v161 = vld [vmem:[%s1 + $0x68] sm:$0xff]
      %v162 = vld [vmem:[%s1 + $0x70] sm:$0xff]
      %v163 = vld [vmem:[%s1 + $0x78] sm:$0xff]
      %v164 = vld [vmem:[%s1 + $0x80] sm:$0xff]
      %v165 = vld [vmem:[%s1 + $0x88] sm:$0xff]
      %v166 = vld [vmem:[%s1 + $0x90] sm:$0xff]
      %v167 = vld [vmem:[%s1 + $0x98] sm:$0xff]
      %v168 = vld [vmem:[%s1 + $0xa0] sm:$0xff]
      %v169 = vld [vmem:[%s1 + $0xa8] sm:$0xff]
      %v170 = vld [vmem:[%s1 + $0xb0] sm:$0xff]
      %v171 = vld [vmem:[%s1 + $0xb8] sm:$0xff]
      %v172 = vld [vmem:[%s1 + $0xc0] sm:$0xff]
      %v173 = vld [vmem:[%s1 + $0xc8] sm:$0xff]
      %v174 = vld [vmem:[%s1 + $0xd0] sm:$0xff]
      %v175 = vld [vmem:[%s1 + $0xd8] sm:$0xff]
      %v176 = vld [vmem:[%s1 + $0xe0] sm:$0xff]
      %v177 = vld [vmem:[%s1 + $0xe8] sm:$0xff]
      %v178 = vld [vmem:[%s1 + $0xf0] sm:$0xff]
      %v179 = vld [vmem:[%s1 + $0xf8] sm:$0xff]
      %v180 = vld [vmem:[%s1 + $0x100] sm:$0xff]
      %v181 = vld [vmem:[%s1 + $0x108] sm:$0xff]
      %v182 = vld [vmem:[%s1 + $0x110] sm:$0xff]
      %v183 = vld [vmem:[%s1 + $0x118] sm:$0xff]
      %v184 = vld [vmem:[%s1 + $0x120] sm:$0xff]
      %v185 = vld [vmem:[%s1 + $0x128] sm:$0xff]
      %v186 = vld [vmem:[%s1 + $0x130] sm:$0xff]
      %v187 = vld [vmem:[%s1 + $0x138] sm:$0xff]
      %v188 = vld [vmem:[%s1 + $0x140] sm:$0xff]
      %v189 = vld [vmem:[%s1 + $0x148] sm:$0xff]
      %v190 = vld [vmem:[%s1 + $0x150] sm:$0xff]
      %v191 = vld [vmem:[%s1 + $0x158] sm:$0xff]
      %v192 = vld [vmem:[%s1 + $0x160] sm:$0xff]
      %v193 = vld [vmem:[%s1 + $0x168] sm:$0xff]
      %v194 = vld [vmem:[%s1 + $0x170] sm:$0xff]
      %v195 = vld [vmem:[%s1 + $0x178] sm:$0xff]
      %v196 = vld [vmem:[%s1 + $0x180] sm:$0xff]
      %v197 = vld [vmem:[%s1 + $0x188] sm:$0xff]
      %v198 = vld [vmem:[%s1 + $0x190] sm:$0xff]
      %v199 = vld [vmem:[%s1 + $0x198] sm:$0xff]
      %v200 = vld [vmem:[%s1 + $0x1a0] sm:$0xff]
      %v201 = vld [vmem:[%s1 + $0x1a8] sm:$0xff]
      %v202 = vld [vmem:[%s1 + $0x1b0] sm:$0xff]
      %v203 = vld [vmem:[%s1 + $0x1b8] sm:$0xff]
      %v204 = vld [vmem:[%s1 + $0x1c0] sm:$0xff]
      %v205 = vld [vmem:[%s1 + $0x1c8] sm:$0xff]
      %v206 = vld [vmem:[%s1 + $0x1d0] sm:$0xff]
      %v207 = vld [vmem:[%s1 + $0x1d8] sm:$0xff]
      %v208 = vld [vmem:[%s1 + $0x1e0] sm:$0xff]
      %v209 = vld [vmem:[%s1 + $0x1e8] sm:$0xff]
      %v210 = vld [vmem:[%s1 + $0x1f0] sm:$0xff]
      %v211 = vld [vmem:[%s1 + $0x1f8] sm:$0xff]
      %v276 = vunpack.c.l.b16 %v148
      %v277 = vunpack.c.h.b16 %v148
      %v278 = vunpack.c.l.b16 %v149
      %v279 = vunpack.c.h.b16 %v149
      %v280 = vunpack.c.l.b16 %v150
      %v281 = vunpack.c.h.b16 %v150
      %v282 = vunpack.c.l.b16 %v151
      %v283 = vunpack.c.h.b16 %v151
      %v284 = vunpack.c.l.b16 %v152
      %v285 = vunpack.c.h.b16 %v152
      %v286 = vunpack.c.l.b16 %v153
      %v287 = vunpack.c.h.b16 %v153
      %v288 = vunpack.c.l.b16 %v154
      %v289 = vunpack.c.h.b16 %v154
      %v290 = vunpack.c.l.b16 %v155
      %v291 = vunpack.c.h.b16 %v155
      %v292 = vunpack.c.l.b16 %v156
      %v293 = vunpack.c.h.b16 %v156
      %v294 = vunpack.c.l.b16 %v157
      %v295 = vunpack.c.h.b16 %v157
      %v296 = vunpack.c.l.b16 %v158
      %v297 = vunpack.c.h.b16 %v158
      %v298 = vunpack.c.l.b16 %v159
      %v299 = vunpack.c.h.b16 %v159
      %v300 = vunpack.c.l.b16 %v160
      %v301 = vunpack.c.h.b16 %v160
      %v302 = vunpack.c.l.b16 %v161
      %v303 = vunpack.c.h.b16 %v161
      %v304 = vunpack.c.l.b16 %v162
      %v305 = vunpack.c.h.b16 %v162
      %v306 = vunpack.c.l.b16 %v163
      %v307 = vunpack.c.h.b16 %v163
      %v308 = vunpack.c.l.b16 %v164
      %v309 = vunpack.c.h.b16 %v164
      %v310 = vunpack.c.l.b16 %v165
      %v311 = vunpack.c.h.b16 %v165
      %v312 = vunpack.c.l.b16 %v166
      %v313 = vunpack.c.h.b16 %v166
      %v314 = vunpack.c.l.b16 %v167
      %v315 = vunpack.c.h.b16 %v167
      %v316 = vunpack.c.l.b16 %v168
      %v317 = vunpack.c.h.b16 %v168
      %v318 = vunpack.c.l.b16 %v169
      %v319 = vunpack.c.h.b16 %v169
      %v320 = vunpack.c.l.b16 %v170
      %v321 = vunpack.c.h.b16 %v170
      %v322 = vunpack.c.l.b16 %v171
      %v323 = vunpack.c.h.b16 %v171
      %v324 = vunpack.c.l.b16 %v172
      %v325 = vunpack.c.h.b16 %v172
      %v326 = vunpack.c.l.b16 %v173
      %v327 = vunpack.c.h.b16 %v173
      %v328 = vunpack.c.l.b16 %v174
      %v329 = vunpack.c.h.b16 %v174
      %v330 = vunpack.c.l.b16 %v175
      %v331 = vunpack.c.h.b16 %v175
      %v332 = vunpack.c.l.b16 %v176
      %v333 = vunpack.c.h.b16 %v176
      %v334 = vunpack.c.l.b16 %v177
      %v335 = vunpack.c.h.b16 %v177
      %v336 = vunpack.c.l.b16 %v178
      %v337 = vunpack.c.h.b16 %v178
      %v338 = vunpack.c.l.b16 %v179
      %v339 = vunpack.c.h.b16 %v179
      %v340 = vunpack.c.l.b16 %v180
      %v341 = vunpack.c.h.b16 %v180
      %v342 = vunpack.c.l.b16 %v181
      %v343 = vunpack.c.h.b16 %v181
      %v344 = vunpack.c.l.b16 %v182
      %v345 = vunpack.c.h.b16 %v182
      %v346 = vunpack.c.l.b16 %v183
      %v347 = vunpack.c.h.b16 %v183
      %v348 = vunpack.c.l.b16 %v184
      %v349 = vunpack.c.h.b16 %v184
      %v350 = vunpack.c.l.b16 %v185
      %v351 = vunpack.c.h.b16 %v185
      %v352 = vunpack.c.l.b16 %v186
      %v353 = vunpack.c.h.b16 %v186
      %v354 = vunpack.c.l.b16 %v187
      %v355 = vunpack.c.h.b16 %v187
      %v356 = vunpack.c.l.b16 %v188
      %v357 = vunpack.c.h.b16 %v188
      %v358 = vunpack.c.l.b16 %v189
      %v359 = vunpack.c.h.b16 %v189
      %v360 = vunpack.c.l.b16 %v190
      %v361 = vunpack.c.h.b16 %v190
      %v362 = vunpack.c.l.b16 %v191
      %v363 = vunpack.c.h.b16 %v191
      %v364 = vunpack.c.l.b16 %v192
      %v365 = vunpack.c.h.b16 %v192
      %v366 = vunpack.c.l.b16 %v193
      %v367 = vunpack.c.h.b16 %v193
      %v368 = vunpack.c.l.b16 %v194
      %v369 = vunpack.c.h.b16 %v194
      %v370 = vunpack.c.l.b16 %v195
      %v371 = vunpack.c.h.b16 %v195
      %v372 = vunpack.c.l.b16 %v196
      %v373 = vunpack.c.h.b16 %v196
      %v374 = vunpack.c.l.b16 %v197
      %v375 = vunpack.c.h.b16 %v197
      %v376 = vunpack.c.l.b16 %v198
      %v377 = vunpack.c.h.b16 %v198
      %v378 = vunpack.c.l.b16 %v199
      %v379 = vunpack.c.h.b16 %v199
      %v380 = vunpack.c.l.b16 %v200
      %v381 = vunpack.c.h.b16 %v200
      %v382 = vunpack.c.l.b16 %v201
      %v383 = vunpack.c.h.b16 %v201
      %v384 = vunpack.c.l.b16 %v202
      %v385 = vunpack.c.h.b16 %v202
      %v386 = vunpack.c.l.b16 %v203
      %v387 = vunpack.c.h.b16 %v203
      %v388 = vunpack.c.l.b16 %v204
      %v389 = vunpack.c.h.b16 %v204
      %v390 = vunpack.c.l.b16 %v205
      %v391 = vunpack.c.h.b16 %v205
      %v392 = vunpack.c.l.b16 %v206
      %v393 = vunpack.c.h.b16 %v206
      %v394 = vunpack.c.l.b16 %v207
      %v395 = vunpack.c.h.b16 %v207
      %v396 = vunpack.c.l.b16 %v208
      %v397 = vunpack.c.h.b16 %v208
      %v398 = vunpack.c.l.b16 %v209
      %v399 = vunpack.c.h.b16 %v209
      %v400 = vunpack.c.l.b16 %v210
      %v401 = vunpack.c.h.b16 %v210
      %v402 = vunpack.c.l.b16 %v211
      %v403 = vunpack.c.h.b16 %v211
      %v404 = vpack.c.b16 %v280, %v276
      %v405 = vpack.c.b16 %v281, %v277
      %v406 = vpack.c.b16 %v282, %v278
      %v407 = vpack.c.b16 %v283, %v279
      %v408 = vpack.c.b16 %v288, %v284
      %v409 = vpack.c.b16 %v289, %v285
      %v410 = vpack.c.b16 %v290, %v286
      %v411 = vpack.c.b16 %v291, %v287
      %v412 = vpack.c.b16 %v296, %v292
      %v413 = vpack.c.b16 %v297, %v293
      %v414 = vpack.c.b16 %v298, %v294
      %v415 = vpack.c.b16 %v299, %v295
      %v416 = vpack.c.b16 %v304, %v300
      %v417 = vpack.c.b16 %v305, %v301
      %v418 = vpack.c.b16 %v306, %v302
      %v419 = vpack.c.b16 %v307, %v303
      %v420 = vpack.c.b16 %v312, %v308
      %v421 = vpack.c.b16 %v313, %v309
      %v422 = vpack.c.b16 %v314, %v310
      %v423 = vpack.c.b16 %v315, %v311
      %v424 = vpack.c.b16 %v320, %v316
      %v425 = vpack.c.b16 %v321, %v317
      %v426 = vpack.c.b16 %v322, %v318
      %v427 = vpack.c.b16 %v323, %v319
      %v428 = vpack.c.b16 %v328, %v324
      %v429 = vpack.c.b16 %v329, %v325
      %v430 = vpack.c.b16 %v330, %v326
      %v431 = vpack.c.b16 %v331, %v327
      %v432 = vpack.c.b16 %v336, %v332
      %v433 = vpack.c.b16 %v337, %v333
      %v434 = vpack.c.b16 %v338, %v334
      %v435 = vpack.c.b16 %v339, %v335
      %v436 = vpack.c.b16 %v344, %v340
      %v437 = vpack.c.b16 %v345, %v341
      %v438 = vpack.c.b16 %v346, %v342
      %v439 = vpack.c.b16 %v347, %v343
      %v440 = vpack.c.b16 %v352, %v348
      %v441 = vpack.c.b16 %v353, %v349
      %v442 = vpack.c.b16 %v354, %v350
      %v443 = vpack.c.b16 %v355, %v351
      %v444 = vpack.c.b16 %v360, %v356
      %v445 = vpack.c.b16 %v361, %v357
      %v446 = vpack.c.b16 %v362, %v358
      %v447 = vpack.c.b16 %v363, %v359
      %v448 = vpack.c.b16 %v368, %v364
      %v449 = vpack.c.b16 %v369, %v365
      %v450 = vpack.c.b16 %v370, %v366
      %v451 = vpack.c.b16 %v371, %v367
      %v452 = vpack.c.b16 %v376, %v372
      %v453 = vpack.c.b16 %v377, %v373
      %v454 = vpack.c.b16 %v378, %v374
      %v455 = vpack.c.b16 %v379, %v375
      %v456 = vpack.c.b16 %v384, %v380
      %v457 = vpack.c.b16 %v385, %v381
      %v458 = vpack.c.b16 %v386, %v382
      %v459 = vpack.c.b16 %v387, %v383
      %v460 = vpack.c.b16 %v392, %v388
      %v461 = vpack.c.b16 %v393, %v389
      %v462 = vpack.c.b16 %v394, %v390
      %v463 = vpack.c.b16 %v395, %v391
      %v464 = vpack.c.b16 %v400, %v396
      %v465 = vpack.c.b16 %v401, %v397
      %v466 = vpack.c.b16 %v402, %v398
      %v467 = vpack.c.b16 %v403, %v399
      %532 = vmatprep.subr.bf16.mxu0 %v405
      %533 = vmatpush1.bf16.msra.mxu0 %v404
      %534 = vmatprep.subr.bf16.mxu0 %v409
      %535 = vmatpush1.bf16.msra.mxu0 %v408
      %536 = vmatprep.subr.bf16.mxu0 %v413
      %537 = vmatpush1.bf16.msra.mxu0 %v412
      %538 = vmatprep.subr.bf16.mxu0 %v417
      %539 = vmatpush1.bf16.msra.mxu0 %v416
      %540 = vmatprep.subr.bf16.mxu0 %v421
      %541 = vmatpush1.bf16.msra.mxu0 %v420
      %542 = vmatprep.subr.bf16.mxu0 %v425
      %543 = vmatpush1.bf16.msra.mxu0 %v424
      %544 = vmatprep.subr.bf16.mxu0 %v429
      %545 = vmatpush1.bf16.msra.mxu0 %v428
      %546 = vmatprep.subr.bf16.mxu0 %v433
      %547 = vmatpush1.bf16.msra.mxu0 %v432
      %548 = vmatprep.subr.bf16.mxu0 %v437
      %549 = vmatpush1.bf16.msra.mxu0 %v436
      %550 = vmatprep.subr.bf16.mxu0 %v441
      %551 = vmatpush1.bf16.msra.mxu0 %v440
      %552 = vmatprep.subr.bf16.mxu0 %v445
      %553 = vmatpush1.bf16.msra.mxu0 %v444
      %554 = vmatprep.subr.bf16.mxu0 %v449
      %555 = vmatpush1.bf16.msra.mxu0 %v448
      %556 = vmatprep.subr.bf16.mxu0 %v453
      %557 = vmatpush1.bf16.msra.mxu0 %v452
      %558 = vmatprep.subr.bf16.mxu0 %v457
      %559 = vmatpush1.bf16.msra.mxu0 %v456
      %560 = vmatprep.subr.bf16.mxu0 %v461
      %561 = vmatpush1.bf16.msra.mxu0 %v460
      %562 = vmatprep.subr.bf16.mxu0 %v465
      %563 = vmatpush1.bf16.msra.mxu0 %v464
      %564 = vmatprep.mubr.bf16.mxu0 %v147
      %565 = vmatmul.mubr.bf16.gmra.mrb[0].mxu0 %v146
      %v566 = vpop.f32.mrb[0].mxu0
      %v567 = vadd.f32 0.0, %v566
      %v568 = vpop.f32.mrb[0].mxu0
      %v569 = vadd.f32 0.0, %v568
      %v570 = vpop.f32.mrb[0].mxu0
      %v571 = vpop.f32.mrb[0].mxu0
      %572 = vdwg.mxu0
      %573 = vmatprep.subr.bf16.mxu0 %v407
      %574 = vmatpush1.bf16.msra.mxu0 %v406
      %575 = vmatprep.subr.bf16.mxu0 %v411
      %576 = vmatpush1.bf16.msra.mxu0 %v410
      %577 = vmatprep.subr.bf16.mxu0 %v415
      %578 = vmatpush1.bf16.msra.mxu0 %v414
      %579 = vmatprep.subr.bf16.mxu0 %v419
      %580 = vmatpush1.bf16.msra.mxu0 %v418
      %581 = vmatprep.subr.bf16.mxu0 %v423
      %582 = vmatpush1.bf16.msra.mxu0 %v422
      %583 = vmatprep.subr.bf16.mxu0 %v427
      %584 = vmatpush1.bf16.msra.mxu0 %v426
      %585 = vmatprep.subr.bf16.mxu0 %v431
      %586 = vmatpush1.bf16.msra.mxu0 %v430
      %587 = vmatprep.subr.bf16.mxu0 %v435
      %588 = vmatpush1.bf16.msra.mxu0 %v434
      %589 = vmatprep.subr.bf16.mxu0 %v439
      %590 = vmatpush1.bf16.msra.mxu0 %v438
      %591 = vmatprep.subr.bf16.mxu0 %v443
      %592 = vmatpush1.bf16.msra.mxu0 %v442
      %593 = vmatprep.subr.bf16.mxu0 %v447
      %594 = vmatpush1.bf16.msra.mxu0 %v446
      %595 = vmatprep.subr.bf16.mxu0 %v451
      %596 = vmatpush1.bf16.msra.mxu0 %v450
      %597 = vmatprep.subr.bf16.mxu0 %v455
      %598 = vmatpush1.bf16.msra.mxu0 %v454
      %599 = vmatprep.subr.bf16.mxu0 %v459
      %600 = vmatpush1.bf16.msra.mxu0 %v458
      %601 = vmatprep.subr.bf16.mxu0 %v463
      %602 = vmatpush1.bf16.msra.mxu0 %v462
      %603 = vmatprep.subr.bf16.mxu0 %v467
      %604 = vmatpush1.bf16.msra.mxu0 %v466
      %605 = vmatprep.mubr.bf16.mxu0 %v147
      %606 = vmatmul.mubr.bf16.gmra.mrb[0].mxu0 %v146
      %v607 = vpop.f32.mrb[0].mxu0
      %v608 = vadd.f32 0.0, %v607
      %v609 = vpop.f32.mrb[0].mxu0
      %v610 = vadd.f32 0.0, %v609
      %v611 = vpop.f32.mrb[0].mxu0
      %v612 = vpop.f32.mrb[0].mxu0
      %613 = vdwg.mxu0
      %v614 = vrot.slane %v567, 4
      %v615 = vadd.f32 %v567, %v614
      %v616 = vrot.slane %v615, 2
      %v617 = vadd.f32 %v615, %v616
      %v618 = vrot.slane %v617, 1
      %v619 = vadd.f32 %v617, %v618
      %v620 = vrot.slane %v569, 4
      %v621 = vadd.f32 %v569, %v620
      %v622 = vrot.slane %v621, 2
      %v623 = vadd.f32 %v621, %v622
      %v624 = vrot.slane %v623, 1
      %v625 = vadd.f32 %v623, %v624
      %v626 = vrot.slane %v608, 4
      %v627 = vadd.f32 %v608, %v626
      %v628 = vrot.slane %v627, 2
      %v629 = vadd.f32 %v627, %v628
      %v630 = vrot.slane %v629, 1
      %v631 = vadd.f32 %v629, %v630
      %v632 = vrot.slane %v610, 4
      %v633 = vadd.f32 %v610, %v632
      %v634 = vrot.slane %v633, 2
      %v635 = vadd.f32 %v633, %v634
      %v636 = vrot.slane %v635, 1
      %v637 = vadd.f32 %v635, %v636
      %v638 = vmul.f32 %v567, %v567
      %v639 = vmul.f32 %v569, %v569
      %v640 = vmul.f32 %v608, %v608
      %v641 = vmul.f32 %v610, %v610
      %v642 = vrot.slane %v638, 4
      %v643 = vadd.f32 %v638, %v642
      %v644 = vrot.slane %v643, 2
      %v645 = vadd.f32 %v643, %v644
      %v646 = vrot.slane %v645, 1
      %v647 = vadd.f32 %v645, %v646
      %v648 = vrot.slane %v639, 4
      %v649 = vadd.f32 %v639, %v648
      %v650 = vrot.slane %v649, 2
      %v651 = vadd.f32 %v649, %v650
      %v652 = vrot.slane %v651, 1
      %v653 = vadd.f32 %v651, %v652
      %v654 = vrot.slane %v640, 4
      %v655 = vadd.f32 %v640, %v654
      %v656 = vrot.slane %v655, 2
      %v657 = vadd.f32 %v655, %v656
      %v658 = vrot.slane %v657, 1
      %v659 = vadd.f32 %v657, %v658
      %v660 = vrot.slane %v641, 4
      %v661 = vadd.f32 %v641, %v660
      %v662 = vrot.slane %v661, 2
      %v663 = vadd.f32 %v661, %v662
      %v664 = vrot.slane %v663, 1
      %v665 = vadd.f32 %v663, %v664
      %vm666 = vcmask 1040384
      %v667 = vsel %vm666, %v619, %v647
      %v668 = vsel %vm666, %v625, %v653
      %v669 = vsel %vm666, %v631, %v659
      %v670 = vsel %vm666, %v637, %v665
      %v675 = vcombine.low %v667, %v668
      %v676 = vcombine.low %v669, %v670
      %v678 = vunpack.c.l.s4 1983009808
      %v679 = vunpack.c.0.s8 %v678
      %v680 = vlaneseq
      %v681 = vshrl.u32 %v680, 7
      %v682 = vsub.s32 %v679, %v681
      %v683 = vrot.slane %v675, %v682
      %v685 = vunpack.c.l.s4 1983009808
      %v686 = vunpack.c.0.s8 %v685
      %v687 = vlaneseq
      %v688 = vshrl.u32 %v687, 7
      %v689 = vsub.s32 %v686, %v688
      %v690 = vrot.slane %v676, %v689
      %v691 = vcombine.low %v683, %v690
      %693 = vst [vmem:[%s143] sm:$0xff] %v691
      %p694 = scmp.lt.s32.totalorder %s13, 1
      %s695 = scalar_select %p694, %s13, 1
      %s696 = smul.addr %s695, 4
      %s697 = smul.addr %s696, 2
      %s698 = scalar_lea.vmem %s2, %s697
      // Predicated region
      $region29: #{convolutional_block_forward.2} parent=27 // pred_check
        %p699 = pneg %p78
      $region30: #{convolutional_block_forward.2} parent=27 // pred_check_branch
        %701 = sbr.rel (%p699) target = $region32
      $region31: #{convolutional_block_forward.2} parent=27 // pred_region
        _
      $region32: #{convolutional_block_forward.2} parent=27 // pred_fallthru
        _
    $region28: #{convolutional_block_forward.2} parent=5 // pred_fallthru
      _
    %p702 = scmp.le.s32.totalorder 2, %s8
    // Predicated region
    $region33: #{convolutional_block_forward.2} parent=5 // pred_check
      %p703 = pneg %p702
    $region34: #{convolutional_block_forward.2} parent=5 // pred_check_branch
      %705 = sbr.rel (%p703) target = $region36
    $region35: #{convolutional_block_forward.2} parent=5 // pred_region
      %s706 = ssub.s32 %s8, 2
      // Predicated region
      $region37: #{convolutional_block_forward.2} parent=35 // pred_check
        %p707 = pneg %p84
      $region38: #{convolutional_block_forward.2} parent=35 // pred_check_branch
        %709 = sbr.rel (%p707) target = $region40
      $region39: #{convolutional_block_forward.2} parent=35 // pred_region
        %p710 = scmp.lt.s32.totalorder %s14, 1
        %s711 = scalar_select %p710, %s14, 1
        %s712 = smul.addr %s711, 4
        %s713 = smul.addr %s712, 2
        %s714 = scalar_lea.vmem %s2, %s713
      $region40: #{convolutional_block_forward.2} parent=35 // pred_fallthru
        _
    $region36: #{convolutional_block_forward.2} parent=5 // pred_fallthru
      _
  $region6: #{convolutional_block_forward.2} parent=0 // loop_footer
    %s12 = sadd.s32 1, %s8
  $region7: #{convolutional_block_forward.2} parent=0 // loop_footer_branch
    %7 = sbr.rel target = $region3
  $region8: #{convolutional_block_forward.2} parent=0 // loop_exit
    _

// kernel: convolutional_block_forward.3
$region0: #{convolutional_block_forward.3}
  #allocation0 [shape = 'u32[]', space=smem, size = 0x4, offset = 0x4, fixed_abs, tag = 'smem constant byte address 0x4 - core index']
  #allocation1 [shape = 'u32[144,128]{1,0:T(1,128)}', space=vmem, size = 0x12000, scoped, tag = 'internal scratch']
  %s0 = inlined_call_operand.vmem [shape: f32[16,256], index: 0, kind: input, shape index: {}]
  %s1 = inlined_call_operand.vmem [shape: bf16[256,512], index: 1, kind: input, shape index: {}]
  %s2 = inlined_call_operand.vmem [shape: f32[1,512], index: 2, kind: input, shape index: {}]
  %s3 = inlined_call_operand.vmem [shape: f32[1,512], index: 3, kind: input, shape index: {}]
  %s4 = inlined_call_operand.vmem [shape: f32[16,512], index: 4, kind: output, shape index: {}]
  %s5 = sld [smem:[#allocation0]]
  $region49: #{convolutional_block_forward.3} parent=0
    _
  %s7 = ssub.s32 1, %s5
  %s8 = scalar_select 0, %s7, %s5
  loop: start=0, step=1, limit=4
  $region2: #{convolutional_block_forward.3} parent=0 // loop_pre_header
    _
  $region3: #{convolutional_block_forward.3} parent=0 // loop_header
    %s10 = sphi 0, %s14
    %p11 = scmp.ge.s32.totalorder %s10, 4
    %s20 = sphi 0, %s22
    %s23 = sphi 0, %s20
    %s24 = sphi 0, %s23
    %s40 = sphi 0, %s24
    %s44 = sphi 0, %s44
    %s46 = sphi 0, %s44
    %s47 = sphi 0, %s46
    %s61 = sphi 0, %s47
    %s65 = sphi 0, %s65
    %s67 = sphi 0, %s65
    %s68 = sphi 0, %s67
    %s82 = sphi 0, %s68
    %s86 = sphi 0, %s86
    %s88 = sphi 0, %s86
    %s89 = sphi 0, %s88
    %s103 = sphi 0, %s89
    %s109 = sphi 0, %s111
    %s112 = sphi 0, %s109
    %s113 = sphi 0, %s112
    %s129 = sphi 0, %s113
  $region4: #{convolutional_block_forward.3} parent=0 // loop_header_branch
    %13 = sbr.rel (%p11) target = $region8
  $region5: #{convolutional_block_forward.3} parent=0 // loop_body
    %s15 = ssub.s32 %s10, 1
    %s16 = ssub.s32 %s10, 2
    %s17 = sadd.s32 %s10, 1
    %s18 = ssub.s32 %s10, %s17
    %p19 = scmp.eq.s32.totalorder %s18, 0
    %s21 = sadd.s32 %s20, 1
    %s22 = scalar_select %p19, %s20, %s21
    %p25 = pneg %p19
    %p26 = scmp.eq.s32.totalorder %s10, 1
    %p27 = por %p25, %p26
    %p28 = scmp.ne.s32.totalorder %s20, %s23
    %p29 = scmp.eq.s32.totalorder %s10, 0
    %p30 = por %p28, %p29
    %p31 = scmp.ne.s32.totalorder %s20, %s23
    %p32 = scmp.eq.s32.totalorder %s15, 1
    %p33 = por %p31, %p32
    %p34 = scmp.ne.s32.totalorder %s23, %s24
    %p35 = scmp.eq.s32.totalorder %s15, 0
    %p36 = por %p34, %p35
    %p37 = scmp.ne.s32.totalorder %s23, %s24
    %p38 = scmp.eq.s32.totalorder %s16, 1
    %p39 = por %p37, %p38
    %p41 = scmp.ne.s32.totalorder %s24, %s40
    %p42 = scmp.eq.s32.totalorder %s16, 0
    %p43 = por %p41, %p42
    %s45 = sadd.s32 %s44, 1
    %p48 = scmp.eq.s32.totalorder %s10, 1
    %p49 = scmp.ne.s32.totalorder %s44, %s46
    %p50 = scmp.eq.s32.totalorder %s10, 0
    %p51 = por %p49, %p50
    %p52 = scmp.ne.s32.totalorder %s44, %s46
    %p53 = scmp.eq.s32.totalorder %s15, 1
    %p54 = por %p52, %p53
    %p55 = scmp.ne.s32.totalorder %s46, %s47
    %p56 = scmp.eq.s32.totalorder %s15, 0
    %p57 = por %p55, %p56
    %p58 = scmp.ne.s32.totalorder %s46, %s47
    %p59 = scmp.eq.s32.totalorder %s16, 1
    %p60 = por %p58, %p59
    %p62 = scmp.ne.s32.totalorder %s47, %s61
    %p63 = scmp.eq.s32.totalorder %s16, 0
    %p64 = por %p62, %p63
    %s66 = sadd.s32 %s65, 1
    %p69 = scmp.eq.s32.totalorder %s10, 1
    %p70 = scmp.ne.s32.totalorder %s65, %s67
    %p71 = scmp.eq.s32.totalorder %s10, 0
    %p72 = por %p70, %p71
    %p73 = scmp.ne.s32.totalorder %s65, %s67
    %p74 = scmp.eq.s32.totalorder %s15, 1
    %p75 = por %p73, %p74
    %p76 = scmp.ne.s32.totalorder %s67, %s68
    %p77 = scmp.eq.s32.totalorder %s15, 0
    %p78 = por %p76, %p77
    %p79 = scmp.ne.s32.totalorder %s67, %s68
    %p80 = scmp.eq.s32.totalorder %s16, 1
    %p81 = por %p79, %p80
    %p83 = scmp.ne.s32.totalorder %s68, %s82
    %p84 = scmp.eq.s32.totalorder %s16, 0
    %p85 = por %p83, %p84
    %s87 = sadd.s32 %s86, 1
    %p90 = scmp.eq.s32.totalorder %s10, 1
    %p91 = scmp.ne.s32.totalorder %s86, %s88
    %p92 = scmp.eq.s32.totalorder %s10, 0
    %p93 = por %p91, %p92
    %p94 = scmp.ne.s32.totalorder %s86, %s88
    %p95 = scmp.eq.s32.totalorder %s15, 1
    %p96 = por %p94, %p95
    %p97 = scmp.ne.s32.totalorder %s88, %s89
    %p98 = scmp.eq.s32.totalorder %s15, 0
    %p99 = por %p97, %p98
    %p100 = scmp.ne.s32.totalorder %s88, %s89
    %p101 = scmp.eq.s32.totalorder %s16, 1
    %p102 = por %p100, %p101
    %p104 = scmp.ne.s32.totalorder %s89, %s103
    %p105 = scmp.eq.s32.totalorder %s16, 0
    %p106 = por %p104, %p105
    %s107 = ssub.s32 %s10, %s17
    %p108 = scmp.eq.s32.totalorder %s107, 0
    %s110 = sadd.s32 %s109, 1
    %s111 = scalar_select %p108, %s109, %s110
    %p114 = pneg %p108
    %p115 = scmp.eq.s32.totalorder %s10, 1
    %p116 = por %p114, %p115
    %p117 = scmp.ne.s32.totalorder %s109, %s112
    %p118 = scmp.eq.s32.totalorder %s10, 0
    %p119 = por %p117, %p118
    %p120 = scmp.ne.s32.totalorder %s109, %s112
    %p121 = scmp.eq.s32.totalorder %s15, 1
    %p122 = por %p120, %p121
    %p123 = scmp.ne.s32.totalorder %s112, %s113
    %p124 = scmp.eq.s32.totalorder %s15, 0
    %p125 = por %p123, %p124
    %p126 = scmp.ne.s32.totalorder %s112, %s113
    %p127 = scmp.eq.s32.totalorder %s16, 1
    %p128 = por %p126, %p127
    %p130 = scmp.ne.s32.totalorder %s113, %s129
    %p131 = scmp.eq.s32.totalorder %s16, 0
    %p132 = por %p130, %p131
    %p133 = scmp.le.s32.totalorder 1, %s10
    %p134 = scmp.lt.s32.totalorder %s10, 3
    %p135 = pnand %p133, %p134
    %p136 = pneg %p135
    // Predicated region
    $region9: #{convolutional_block_forward.3} parent=5 // pred_check
      _
    $region10: #{convolutional_block_forward.3} parent=5 // pred_check_branch
      %138 = sbr.rel (%p135) target = $region12
    $region11: #{convolutional_block_forward.3} parent=5 // pred_region
      %s139 = ssub.s32 %s10, 1
      // Predicated region
      $region13: #{convolutional_block_forward.3} parent=11 // pred_check
        %p140 = pneg %p57
      $region14: #{convolutional_block_forward.3} parent=11 // pred_check_branch
        %142 = sbr.rel (%p140) target = $region16
      $region15: #{convolutional_block_forward.3} parent=11 // pred_region
        _
      $region16: #{convolutional_block_forward.3} parent=11 // pred_fallthru
        _
      // Predicated region
      $region17: #{convolutional_block_forward.3} parent=11 // pred_check
        %p143 = pneg %p78
      $region18: #{convolutional_block_forward.3} parent=11 // pred_check_branch
        %145 = sbr.rel (%p143) target = $region20
      $region19: #{convolutional_block_forward.3} parent=11 // pred_region
        _
      $region20: #{convolutional_block_forward.3} parent=11 // pred_fallthru
        _
      // Predicated region
      $region21: #{convolutional_block_forward.3} parent=11 // pred_check
        %p146 = pneg %p99
      $region22: #{convolutional_block_forward.3} parent=11 // pred_check_branch
        %148 = sbr.rel (%p146) target = $region24
      $region23: #{convolutional_block_forward.3} parent=11 // pred_region
        _
      $region24: #{convolutional_block_forward.3} parent=11 // pred_fallthru
        _
    $region12: #{convolutional_block_forward.3} parent=5 // pred_fallthru
      _
    %p149 = scmp.lt.s32.totalorder %s10, 2
    // Predicated region
    $region25: #{convolutional_block_forward.3} parent=5 // pred_check
      %p150 = pneg %p149
    $region26: #{convolutional_block_forward.3} parent=5 // pred_check_branch
      %152 = sbr.rel (%p150) target = $region28
    $region27: #{convolutional_block_forward.3} parent=5 // pred_region
      // Predicated region
      $region29: #{convolutional_block_forward.3} parent=27 // pred_check
        %p153 = pneg %p30
      $region30: #{convolutional_block_forward.3} parent=27 // pred_check_branch
        %155 = sbr.rel (%p153) target = $region32
      $region31: #{convolutional_block_forward.3} parent=27 // pred_region
        %p156 = scmp.lt.s32.totalorder %s10, 1
        %s157 = scalar_select %p156, %s10, 1
        %s158 = smul.addr %s157, 2
        %s159 = smul.addr %s158, 8
        %s160 = scalar_lea.vmem %s0, %s159
      $region32: #{convolutional_block_forward.3} parent=27 // pred_fallthru
        _
    $region28: #{convolutional_block_forward.3} parent=5 // pred_fallthru
      _
    %p161 = scmp.le.s32.totalorder 1, %s10
    %p162 = scmp.lt.s32.totalorder %s10, 3
    %p163 = pnand %p161, %p162
    %p164 = pneg %p163
    // Predicated region
    $region33: #{convolutional_block_forward.3} parent=5 // pred_check
      _
    $region34: #{convolutional_block_forward.3} parent=5 // pred_check_branch
      %166 = sbr.rel (%p163) target = $region36
    $region35: #{convolutional_block_forward.3} parent=5 // pred_region
      %s167 = ssub.s32 %s10, 1
      %p168 = scmp.lt.s32.totalorder %s15, 1
      %s169 = scalar_select %p168, %s15, 1
      %s170 = smul.addr %s169, 2
      %s171 = smul.addr %s170, 8
      %s172 = scalar_lea.vmem %s0, %s171
      %p173 = pneg %p36
      %p174 = pneg %p33
      %p175 = pneg %p57
      %p176 = pneg %p54
      %p177 = pneg %p78
      %p178 = pneg %p75
      %p179 = pneg %p99
      %p180 = pneg %p96
      %p181 = pneg %p125
      %p182 = pneg %p122
      %p183 = scmp.lt.s32.totalorder %s15, 1
      %s184 = scalar_select %p183, %s15, 1
      %s185 = smul.addr %s184, 4
      %s186 = smul.addr %s185, 8
      %s187 = scalar_lea.vmem %s4, %s186
      %p188 = scmp.lt.s32.totalorder %s15, 1
      %s189 = scalar_select %p188, %s15, 1
      %s190 = smul.addr %s189, 2
      %s191 = smul.addr %s190, 8
      %s192 = scalar_lea.vmem %s0, %s191
      %p193 = scmp.lt.s32.totalorder %s15, 1
      %s194 = scalar_select %p193, %s15, 1
      %s195 = smul.addr %s194, 4
      %s196 = smul.addr %s195, 8
      %s197 = scalar_lea.vmem %s4, %s196
      %v198 = vld [vmem:[%s192] sm:$0xff]
      %v199 = vld [vmem:[%s192 + $0x8] sm:$0xff]
      %v200 = vpack.c.bf16 %v198, %v198
      %v201 = vpack.c.bf16 %v199, %v199
      %v202 = vld [vmem:[%s1] sm:$0xff]
      %v203 = vld [vmem:[%s1 + $0x8] sm:$0xff]
      %v204 = vld [vmem:[%s1 + $0x10] sm:$0xff]
      %v205 = vld [vmem:[%s1 + $0x18] sm:$0xff]
      %v206 = vld [vmem:[%s1 + $0x20] sm:$0xff]
      %v207 = vld [vmem:[%s1 + $0x28] sm:$0xff]
      %v208 = vld [vmem:[%s1 + $0x30] sm:$0xff]
      %v209 = vld [vmem:[%s1 + $0x38] sm:$0xff]
      %v210 = vld [vmem:[%s1 + $0x40] sm:$0xff]
      %v211 = vld [vmem:[%s1 + $0x48] sm:$0xff]
      %v212 = vld [vmem:[%s1 + $0x50] sm:$0xff]
      %v213 = vld [vmem:[%s1 + $0x58] sm:$0xff]
      %v214 = vld [vmem:[%s1 + $0x60] sm:$0xff]
      %v215 = vld [vmem:[%s1 + $0x68] sm:$0xff]
      %v216 = vld [vmem:[%s1 + $0x70] sm:$0xff]
      %v217 = vld [vmem:[%s1 + $0x78] sm:$0xff]
      %v218 = vld [vmem:[%s1 + $0x80] sm:$0xff]
      %v219 = vld [vmem:[%s1 + $0x88] sm:$0xff]
      %v220 = vld [vmem:[%s1 + $0x90] sm:$0xff]
      %v221 = vld [vmem:[%s1 + $0x98] sm:$0xff]
      %v222 = vld [vmem:[%s1 + $0xa0] sm:$0xff]
      %v223 = vld [vmem:[%s1 + $0xa8] sm:$0xff]
      %v224 = vld [vmem:[%s1 + $0xb0] sm:$0xff]
      %v225 = vld [vmem:[%s1 + $0xb8] sm:$0xff]
      %v226 = vld [vmem:[%s1 + $0xc0] sm:$0xff]
      %v227 = vld [vmem:[%s1 + $0xc8] sm:$0xff]
      %v228 = vld [vmem:[%s1 + $0xd0] sm:$0xff]
      %v229 = vld [vmem:[%s1 + $0xd8] sm:$0xff]
      %v230 = vld [vmem:[%s1 + $0xe0] sm:$0xff]
      %v231 = vld [vmem:[%s1 + $0xe8] sm:$0xff]
      %v232 = vld [vmem:[%s1 + $0xf0] sm:$0xff]
      %v233 = vld [vmem:[%s1 + $0xf8] sm:$0xff]
      %v234 = vld [vmem:[%s1 + $0x100] sm:$0xff]
      %v235 = vld [vmem:[%s1 + $0x108] sm:$0xff]
      %v236 = vld [vmem:[%s1 + $0x110] sm:$0xff]
      %v237 = vld [vmem:[%s1 + $0x118] sm:$0xff]
      %v238 = vld [vmem:[%s1 + $0x120] sm:$0xff]
      %v239 = vld [vmem:[%s1 + $0x128] sm:$0xff]
      %v240 = vld [vmem:[%s1 + $0x130] sm:$0xff]
      %v241 = vld [vmem:[%s1 + $0x138] sm:$0xff]
      %v242 = vld [vmem:[%s1 + $0x140] sm:$0xff]
      %v243 = vld [vmem:[%s1 + $0x148] sm:$0xff]
      %v244 = vld [vmem:[%s1 + $0x150] sm:$0xff]
      %v245 = vld [vmem:[%s1 + $0x158] sm:$0xff]
      %v246 = vld [vmem:[%s1 + $0x160] sm:$0xff]
      %v247 = vld [vmem:[%s1 + $0x168] sm:$0xff]
      %v248 = vld [vmem:[%s1 + $0x170] sm:$0xff]
      %v249 = vld [vmem:[%s1 + $0x178] sm:$0xff]
      %v250 = vld [vmem:[%s1 + $0x180] sm:$0xff]
      %v251 = vld [vmem:[%s1 + $0x188] sm:$0xff]
      %v252 = vld [vmem:[%s1 + $0x190] sm:$0xff]
      %v253 = vld [vmem:[%s1 + $0x198] sm:$0xff]
      %v254 = vld [vmem:[%s1 + $0x1a0] sm:$0xff]
      %v255 = vld [vmem:[%s1 + $0x1a8] sm:$0xff]
      %v256 = vld [vmem:[%s1 + $0x1b0] sm:$0xff]
      %v257 = vld [vmem:[%s1 + $0x1b8] sm:$0xff]
      %v258 = vld [vmem:[%s1 + $0x1c0] sm:$0xff]
      %v259 = vld [vmem:[%s1 + $0x1c8] sm:$0xff]
      %v260 = vld [vmem:[%s1 + $0x1d0] sm:$0xff]
      %v261 = vld [vmem:[%s1 + $0x1d8] sm:$0xff]
      %v262 = vld [vmem:[%s1 + $0x1e0] sm:$0xff]
      %v263 = vld [vmem:[%s1 + $0x1e8] sm:$0xff]
      %v264 = vld [vmem:[%s1 + $0x1f0] sm:$0xff]
      %v265 = vld [vmem:[%s1 + $0x1f8] sm:$0xff]
      %v330 = vunpack.c.l.b16 %v202
      %v331 = vunpack.c.h.b16 %v202
      %v332 = vunpack.c.l.b16 %v203
      %v333 = vunpack.c.h.b16 %v203
      %v334 = vunpack.c.l.b16 %v204
      %v335 = vunpack.c.h.b16 %v204
      %v336 = vunpack.c.l.b16 %v205
      %v337 = vunpack.c.h.b16 %v205
      %v338 = vunpack.c.l.b16 %v206
      %v339 = vunpack.c.h.b16 %v206
      %v340 = vunpack.c.l.b16 %v207
      %v341 = vunpack.c.h.b16 %v207
      %v342 = vunpack.c.l.b16 %v208
      %v343 = vunpack.c.h.b16 %v208
      %v344 = vunpack.c.l.b16 %v209
      %v345 = vunpack.c.h.b16 %v209
      %v346 = vunpack.c.l.b16 %v210
      %v347 = vunpack.c.h.b16 %v210
      %v348 = vunpack.c.l.b16 %v211
      %v349 = vunpack.c.h.b16 %v211
      %v350 = vunpack.c.l.b16 %v212
      %v351 = vunpack.c.h.b16 %v212
      %v352 = vunpack.c.l.b16 %v213
      %v353 = vunpack.c.h.b16 %v213
      %v354 = vunpack.c.l.b16 %v214
      %v355 = vunpack.c.h.b16 %v214
      %v356 = vunpack.c.l.b16 %v215
      %v357 = vunpack.c.h.b16 %v215
      %v358 = vunpack.c.l.b16 %v216
      %v359 = vunpack.c.h.b16 %v216
      %v360 = vunpack.c.l.b16 %v217
      %v361 = vunpack.c.h.b16 %v217
      %v362 = vunpack.c.l.b16 %v218
      %v363 = vunpack.c.h.b16 %v218
      %v364 = vunpack.c.l.b16 %v219
      %v365 = vunpack.c.h.b16 %v219
      %v366 = vunpack.c.l.b16 %v220
      %v367 = vunpack.c.h.b16 %v220
      %v368 = vunpack.c.l.b16 %v221
      %v369 = vunpack.c.h.b16 %v221
      %v370 = vunpack.c.l.b16 %v222
      %v371 = vunpack.c.h.b16 %v222
      %v372 = vunpack.c.l.b16 %v223
      %v373 = vunpack.c.h.b16 %v223
      %v374 = vunpack.c.l.b16 %v224
      %v375 = vunpack.c.h.b16 %v224
      %v376 = vunpack.c.l.b16 %v225
      %v377 = vunpack.c.h.b16 %v225
      %v378 = vunpack.c.l.b16 %v226
      %v379 = vunpack.c.h.b16 %v226
      %v380 = vunpack.c.l.b16 %v227
      %v381 = vunpack.c.h.b16 %v227
      %v382 = vunpack.c.l.b16 %v228
      %v383 = vunpack.c.h.b16 %v228
      %v384 = vunpack.c.l.b16 %v229
      %v385 = vunpack.c.h.b16 %v229
      %v386 = vunpack.c.l.b16 %v230
      %v387 = vunpack.c.h.b16 %v230
      %v388 = vunpack.c.l.b16 %v231
      %v389 = vunpack.c.h.b16 %v231
      %v390 = vunpack.c.l.b16 %v232
      %v391 = vunpack.c.h.b16 %v232
      %v392 = vunpack.c.l.b16 %v233
      %v393 = vunpack.c.h.b16 %v233
      %v394 = vunpack.c.l.b16 %v234
      %v395 = vunpack.c.h.b16 %v234
      %v396 = vunpack.c.l.b16 %v235
      %v397 = vunpack.c.h.b16 %v235
      %v398 = vunpack.c.l.b16 %v236
      %v399 = vunpack.c.h.b16 %v236
      %v400 = vunpack.c.l.b16 %v237
      %v401 = vunpack.c.h.b16 %v237
      %v402 = vunpack.c.l.b16 %v238
      %v403 = vunpack.c.h.b16 %v238
      %v404 = vunpack.c.l.b16 %v239
      %v405 = vunpack.c.h.b16 %v239
      %v406 = vunpack.c.l.b16 %v240
      %v407 = vunpack.c.h.b16 %v240
      %v408 = vunpack.c.l.b16 %v241
      %v409 = vunpack.c.h.b16 %v241
      %v410 = vunpack.c.l.b16 %v242
      %v411 = vunpack.c.h.b16 %v242
      %v412 = vunpack.c.l.b16 %v243
      %v413 = vunpack.c.h.b16 %v243
      %v414 = vunpack.c.l.b16 %v244
      %v415 = vunpack.c.h.b16 %v244
      %v416 = vunpack.c.l.b16 %v245
      %v417 = vunpack.c.h.b16 %v245
      %v418 = vunpack.c.l.b16 %v246
      %v419 = vunpack.c.h.b16 %v246
      %v420 = vunpack.c.l.b16 %v247
      %v421 = vunpack.c.h.b16 %v247
      %v422 = vunpack.c.l.b16 %v248
      %v423 = vunpack.c.h.b16 %v248
      %v424 = vunpack.c.l.b16 %v249
      %v425 = vunpack.c.h.b16 %v249
      %v426 = vunpack.c.l.b16 %v250
      %v427 = vunpack.c.h.b16 %v250
      %v428 = vunpack.c.l.b16 %v251
      %v429 = vunpack.c.h.b16 %v251
      %v430 = vunpack.c.l.b16 %v252
      %v431 = vunpack.c.h.b16 %v252
      %v432 = vunpack.c.l.b16 %v253
      %v433 = vunpack.c.h.b16 %v253
      %v434 = vunpack.c.l.b16 %v254
      %v435 = vunpack.c.h.b16 %v254
      %v436 = vunpack.c.l.b16 %v255
      %v437 = vunpack.c.h.b16 %v255
      %v438 = vunpack.c.l.b16 %v256
      %v439 = vunpack.c.h.b16 %v256
      %v440 = vunpack.c.l.b16 %v257
      %v441 = vunpack.c.h.b16 %v257
      %v442 = vunpack.c.l.b16 %v258
      %v443 = vunpack.c.h.b16 %v258
      %v444 = vunpack.c.l.b16 %v259
      %v445 = vunpack.c.h.b16 %v259
      %v446 = vunpack.c.l.b16 %v260
      %v447 = vunpack.c.h.b16 %v260
      %v448 = vunpack.c.l.b16 %v261
      %v449 = vunpack.c.h.b16 %v261
      %v450 = vunpack.c.l.b16 %v262
      %v451 = vunpack.c.h.b16 %v262
      %v452 = vunpack.c.l.b16 %v263
      %v453 = vunpack.c.h.b16 %v263
      %v454 = vunpack.c.l.b16 %v264
      %v455 = vunpack.c.h.b16 %v264
      %v456 = vunpack.c.l.b16 %v265
      %v457 = vunpack.c.h.b16 %v265
      %v458 = vpack.c.b16 %v334, %v330
      %v459 = vpack.c.b16 %v335, %v331
      %v460 = vpack.c.b16 %v336, %v332
      %v461 = vpack.c.b16 %v337, %v333
      %v462 = vpack.c.b16 %v342, %v338
      %v463 = vpack.c.b16 %v343, %v339
      %v464 = vpack.c.b16 %v344, %v340
      %v465 = vpack.c.b16 %v345, %v341
      %v466 = vpack.c.b16 %v350, %v346
      %v467 = vpack.c.b16 %v351, %v347
      %v468 = vpack.c.b16 %v352, %v348
      %v469 = vpack.c.b16 %v353, %v349
      %v470 = vpack.c.b16 %v358, %v354
      %v471 = vpack.c.b16 %v359, %v355
      %v472 = vpack.c.b16 %v360, %v356
      %v473 = vpack.c.b16 %v361, %v357
      %v474 = vpack.c.b16 %v366, %v362
      %v475 = vpack.c.b16 %v367, %v363
      %v476 = vpack.c.b16 %v368, %v364
      %v477 = vpack.c.b16 %v369, %v365
      %v478 = vpack.c.b16 %v374, %v370
      %v479 = vpack.c.b16 %v375, %v371
      %v480 = vpack.c.b16 %v376, %v372
      %v481 = vpack.c.b16 %v377, %v373
      %v482 = vpack.c.b16 %v382, %v378
      %v483 = vpack.c.b16 %v383, %v379
      %v484 = vpack.c.b16 %v384, %v380
      %v485 = vpack.c.b16 %v385, %v381
      %v486 = vpack.c.b16 %v390, %v386
      %v487 = vpack.c.b16 %v391, %v387
      %v488 = vpack.c.b16 %v392, %v388
      %v489 = vpack.c.b16 %v393, %v389
      %v490 = vpack.c.b16 %v398, %v394
      %v491 = vpack.c.b16 %v399, %v395
      %v492 = vpack.c.b16 %v400, %v396
      %v493 = vpack.c.b16 %v401, %v397
      %v494 = vpack.c.b16 %v406, %v402
      %v495 = vpack.c.b16 %v407, %v403
      %v496 = vpack.c.b16 %v408, %v404
      %v497 = vpack.c.b16 %v409, %v405
      %v498 = vpack.c.b16 %v414, %v410
      %v499 = vpack.c.b16 %v415, %v411
      %v500 = vpack.c.b16 %v416, %v412
      %v501 = vpack.c.b16 %v417, %v413
      %v502 = vpack.c.b16 %v422, %v418
      %v503 = vpack.c.b16 %v423, %v419
      %v504 = vpack.c.b16 %v424, %v420
      %v505 = vpack.c.b16 %v425, %v421
      %v506 = vpack.c.b16 %v430, %v426
      %v507 = vpack.c.b16 %v431, %v427
      %v508 = vpack.c.b16 %v432, %v428
      %v509 = vpack.c.b16 %v433, %v429
      %v510 = vpack.c.b16 %v438, %v434
      %v511 = vpack.c.b16 %v439, %v435
      %v512 = vpack.c.b16 %v440, %v436
      %v513 = vpack.c.b16 %v441, %v437
      %v514 = vpack.c.b16 %v446, %v442
      %v515 = vpack.c.b16 %v447, %v443
      %v516 = vpack.c.b16 %v448, %v444
      %v517 = vpack.c.b16 %v449, %v445
      %v518 = vpack.c.b16 %v454, %v450
      %v519 = vpack.c.b16 %v455, %v451
      %v520 = vpack.c.b16 %v456, %v452
      %v521 = vpack.c.b16 %v457, %v453
      %586 = vmatprep.subr.bf16.mxu0 %v459
      %587 = vmatpush1.bf16.msra.mxu0 %v458
      %588 = vmatprep.subr.bf16.mxu0 %v463
      %589 = vmatpush1.bf16.msra.mxu0 %v462
      %590 = vmatprep.subr.bf16.mxu0 %v467
      %591 = vmatpush1.bf16.msra.mxu0 %v466
      %592 = vmatprep.subr.bf16.mxu0 %v471
      %593 = vmatpush1.bf16.msra.mxu0 %v470
      %594 = vmatprep.subr.bf16.mxu0 %v475
      %595 = vmatpush1.bf16.msra.mxu0 %v474
      %596 = vmatprep.subr.bf16.mxu0 %v479
      %597 = vmatpush1.bf16.msra.mxu0 %v478
      %598 = vmatprep.subr.bf16.mxu0 %v483
      %599 = vmatpush1.bf16.msra.mxu0 %v482
      %600 = vmatprep.subr.bf16.mxu0 %v487
      %601 = vmatpush1.bf16.msra.mxu0 %v486
      %602 = vmatprep.subr.bf16.mxu0 %v491
      %603 = vmatpush1.bf16.msra.mxu0 %v490
      %604 = vmatprep.subr.bf16.mxu0 %v495
      %605 = vmatpush1.bf16.msra.mxu0 %v494
      %606 = vmatprep.subr.bf16.mxu0 %v499
      %607 = vmatpush1.bf16.msra.mxu0 %v498
      %608 = vmatprep.subr.bf16.mxu0 %v503
      %609 = vmatpush1.bf16.msra.mxu0 %v502
      %610 = vmatprep.subr.bf16.mxu0 %v507
      %611 = vmatpush1.bf16.msra.mxu0 %v506
      %612 = vmatprep.subr.bf16.mxu0 %v511
      %613 = vmatpush1.bf16.msra.mxu0 %v510
      %614 = vmatprep.subr.bf16.mxu0 %v515
      %615 = vmatpush1.bf16.msra.mxu0 %v514
      %616 = vmatprep.subr.bf16.mxu0 %v519
      %617 = vmatpush1.bf16.msra.mxu0 %v518
      %618 = vmatprep.mubr.bf16.mxu0 %v201
      %619 = vmatmul.mubr.bf16.gmra.mrb[0].mxu0 %v200
      %v620 = vpop.f32.mrb[0].mxu0
      %v621 = vadd.f32 0.0, %v620
      %v622 = vpop.f32.mrb[0].mxu0
      %v623 = vadd.f32 0.0, %v622
      %v624 = vpop.f32.mrb[0].mxu0
      %v625 = vpop.f32.mrb[0].mxu0
      %626 = vdwg.mxu0
      %627 = vmatprep.subr.bf16.mxu0 %v461
      %628 = vmatpush1.bf16.msra.mxu0 %v460
      %629 = vmatprep.subr.bf16.mxu0 %v465
      %630 = vmatpush1.bf16.msra.mxu0 %v464
      %631 = vmatprep.subr.bf16.mxu0 %v469
      %632 = vmatpush1.bf16.msra.mxu0 %v468
      %633 = vmatprep.subr.bf16.mxu0 %v473
      %634 = vmatpush1.bf16.msra.mxu0 %v472
      %635 = vmatprep.subr.bf16.mxu0 %v477
      %636 = vmatpush1.bf16.msra.mxu0 %v476
      %637 = vmatprep.subr.bf16.mxu0 %v481
      %638 = vmatpush1.bf16.msra.mxu0 %v480
      %639 = vmatprep.subr.bf16.mxu0 %v485
      %640 = vmatpush1.bf16.msra.mxu0 %v484
      %641 = vmatprep.subr.bf16.mxu0 %v489
      %642 = vmatpush1.bf16.msra.mxu0 %v488
      %643 = vmatprep.subr.bf16.mxu0 %v493
      %644 = vmatpush1.bf16.msra.mxu0 %v492
      %645 = vmatprep.subr.bf16.mxu0 %v497
      %646 = vmatpush1.bf16.msra.mxu0 %v496
      %647 = vmatprep.subr.bf16.mxu0 %v501
      %648 = vmatpush1.bf16.msra.mxu0 %v500
      %649 = vmatprep.subr.bf16.mxu0 %v505
      %650 = vmatpush1.bf16.msra.mxu0 %v504
      %651 = vmatprep.subr.bf16.mxu0 %v509
      %652 = vmatpush1.bf16.msra.mxu0 %v508
      %653 = vmatprep.subr.bf16.mxu0 %v513
      %654 = vmatpush1.bf16.msra.mxu0 %v512
      %655 = vmatprep.subr.bf16.mxu0 %v517
      %656 = vmatpush1.bf16.msra.mxu0 %v516
      %657 = vmatprep.subr.bf16.mxu0 %v521
      %658 = vmatpush1.bf16.msra.mxu0 %v520
      %659 = vmatprep.mubr.bf16.mxu0 %v201
      %660 = vmatmul.mubr.bf16.gmra.mrb[0].mxu0 %v200
      %v661 = vpop.f32.mrb[0].mxu0
      %v662 = vadd.f32 0.0, %v661
      %v663 = vpop.f32.mrb[0].mxu0
      %v664 = vadd.f32 0.0, %v663
      %v665 = vpop.f32.mrb[0].mxu0
      %v666 = vpop.f32.mrb[0].mxu0
      %667 = vdwg.mxu0
      %v668 = vld [vmem:[%s2] sm:$0xf]
      %v670 = vlaneseq
      %v671 = vshrl.u32 %v670, 7
      %v672 = vsub.s32 0, %v671
      %v673 = vrot.slane %v668, %v672
      %v674 = vlaneseq
      %v675 = vshrl.u32 %v674, 7
      %v676 = vsub.s32 1, %v675
      %v677 = vrot.slane %v668, %v676
      %v678 = vlaneseq
      %v679 = vshrl.u32 %v678, 7
      %v680 = vsub.s32 2, %v679
      %v681 = vrot.slane %v668, %v680
      %v682 = vlaneseq
      %v683 = vshrl.u32 %v682, 7
      %v684 = vsub.s32 3, %v683
      %v685 = vrot.slane %v668, %v684
      %v690 = vmul.f32 %v621, %v673
      %v691 = vmul.f32 %v623, %v677
      %v692 = vmul.f32 %v662, %v681
      %v693 = vmul.f32 %v664, %v685
      %v694 = vld [vmem:[%s3] sm:$0xf]
      %v696 = vlaneseq
      %v697 = vshrl.u32 %v696, 7
      %v698 = vsub.s32 0, %v697
      %v699 = vrot.slane %v694, %v698
      %v700 = vlaneseq
      %v701 = vshrl.u32 %v700, 7
      %v702 = vsub.s32 1, %v701
      %v703 = vrot.slane %v694, %v702
      %v704 = vlaneseq
      %v705 = vshrl.u32 %v704, 7
      %v706 = vsub.s32 2, %v705
      %v707 = vrot.slane %v694, %v706
      %v708 = vlaneseq
      %v709 = vshrl.u32 %v708, 7
      %v710 = vsub.s32 3, %v709
      %v711 = vrot.slane %v694, %v710
      %v716 = vadd.f32 %v690, %v699
      %v717 = vadd.f32 %v691, %v703
      %v718 = vadd.f32 %v692, %v707
      %v719 = vadd.f32 %v693, %v711
      %v720 = vmax.f32 %v716, 0.0
      %v721 = vmax.f32 %v717, 0.0
      %v722 = vmax.f32 %v718, 0.0
      %v723 = vmax.f32 %v719, 0.0
      %724 = vst [vmem:[%s197] sm:$0xff] %v720
      %725 = vst [vmem:[%s197 + $0x8] sm:$0xff] %v721
      %726 = vst [vmem:[%s197 + $0x10] sm:$0xff] %v722
      %727 = vst [vmem:[%s197 + $0x18] sm:$0xff] %v723
      %p728 = scmp.lt.s32.totalorder %s15, 1
      %s729 = scalar_select %p728, %s15, 1
      %s730 = smul.addr %s729, 4
      %s731 = smul.addr %s730, 8
      %s732 = scalar_lea.vmem %s4, %s731
      // Predicated region
      $region37: #{convolutional_block_forward.3} parent=35 // pred_check
        %p733 = pneg %p122
      $region38: #{convolutional_block_forward.3} parent=35 // pred_check_branch
        %735 = sbr.rel (%p733) target = $region40
      $region39: #{convolutional_block_forward.3} parent=35 // pred_region
        _
      $region40: #{convolutional_block_forward.3} parent=35 // pred_fallthru
        _
    $region36: #{convolutional_block_forward.3} parent=5 // pred_fallthru
      _
    %p736 = scmp.le.s32.totalorder 2, %s10
    // Predicated region
    $region41: #{convolutional_block_forward.3} parent=5 // pred_check
      %p737 = pneg %p736
    $region42: #{convolutional_block_forward.3} parent=5 // pred_check_branch
      %739 = sbr.rel (%p737) target = $region44
    $region43: #{convolutional_block_forward.3} parent=5 // pred_region
      %s740 = ssub.s32 %s10, 2
      // Predicated region
      $region45: #{convolutional_block_forward.3} parent=43 // pred_check
        %p741 = pneg %p128
      $region46: #{convolutional_block_forward.3} parent=43 // pred_check_branch
        %743 = sbr.rel (%p741) target = $region48
      $region47: #{convolutional_block_forward.3} parent=43 // pred_region
        %p744 = scmp.lt.s32.totalorder %s16, 1
        %s745 = scalar_select %p744, %s16, 1
        %s746 = smul.addr %s745, 4
        %s747 = smul.addr %s746, 8
        %s748 = scalar_lea.vmem %s4, %s747
      $region48: #{convolutional_block_forward.3} parent=43 // pred_fallthru
        _
    $region44: #{convolutional_block_forward.3} parent=5 // pred_fallthru
      _
  $region6: #{convolutional_block_forward.3} parent=0 // loop_footer
    %s14 = sadd.s32 1, %s10
  $region7: #{convolutional_block_forward.3} parent=0 // loop_footer_branch
    %9 = sbr.rel target = $region3
  $region8: #{convolutional_block_forward.3} parent=0 // loop_exit
    _

</llo_original>
